<compile_context>
chip_gen: v6e
topology: v6e:2x2x1
jax: 0.10.0
libtpu: 0.0.40
codegen_flags: <defaults>
</compile_context>

<pallas_src>
import functools

import jax
import jax.numpy as jnp
from jax.experimental import pallas as pl
from jax.experimental.pallas import tpu as pltpu


_LANE_CHUNK = 512        # in-kernel compute chunk (lanes); keeps the (N, chunk) h in vregs
_TB_CAP = 64 * 1024      # max batch tile: ~1 MiB of x per grid step at d=4


def _round_up(a, m):
    return ((a + m - 1) // m) * m


# ----------------------------------------------------------------------------
# Kernel
# ----------------------------------------------------------------------------
def _regression_cubical_kernel(
    xt_ref,    # (d, TB)   input batch tile, transposed (batch on lanes)
    w_ref,     # (N, d)    pre-folded effective first-layer weight   (resident)
    b1_ref,    # (N, 1)    hidden bias (column)                      (resident)
    cw_ref,    # (1, N)    fused layer2+output weight (row)          (resident)
    cb_ref,    # (1, 1)    fused layer2+output bias (SMEM scalar)
    out_ref,   # (1, TB)   output tile (lane-dense)
    *,
    threshold_prediction: bool,
    num_labels: int,
    chunk: int,
):
    n, _ = w_ref.shape
    tb = out_ref.shape[1]
    n_chunks = tb // chunk

    w = w_ref[...]                                   # (N, d)
    cw = cw_ref[...]                                 # (1, N)
    cb = cb_ref[0, 0]                                # scalar (SMEM)
    # hoist the lane-broadcast of the bias out of the chunk loop
    b1 = jnp.broadcast_to(b1_ref[...], (n, chunk))   # (N, chunk)

    @pl.loop(0, n_chunks)
    def _(c):
        start = pl.multiple_of(c * chunk, chunk)
        xt = xt_ref[:, pl.ds(start, chunk)]                                   # (d, chunk)

        # hidden pre-activation on the MXU:  h[j, b] = sum_i W_eff[j, i] * x[b, i] + b1[j]
        h = jnp.dot(w, xt, preferred_element_type=jnp.float32) + b1          # (N, chunk)

        # Hardtanh(min_val=0, max_val=1)
        h = jnp.clip(h, 0.0, 1.0)

        # fused layer2 + output_layer as an MXU mat-vec (VALU/XLU stay free):
        #   out[b] = sum_j cw[j] * h[j, b] + cb
        o = jnp.dot(cw, h, preferred_element_type=jnp.float32) + cb          # (1, chunk)

        if threshold_prediction:
            o = jnp.clip(o, 0.0, float(num_labels - 1))

        out_ref[:, pl.ds(start, chunk)] = o.astype(out_ref.dtype)


# ----------------------------------------------------------------------------
# Wrapper
# ----------------------------------------------------------------------------
def fold_params(params):
    """Parameter-only algebra (independent of x). Hoist out of the per-call path."""
    s, g, c_col, bias_row, w2, b2_row, w3, b3_row = params
    N = bias_row.shape[1]
    w_eff = (g @ s) * c_col                       # (N, d)  effective layer-1 weight
    bias_col = bias_row.reshape(N, 1)             # (N, 1)
    cw_row = (w3 @ w2).reshape(1, N)              # (1, N)  fused layer2 + output weight
    cb = (b2_row @ w3.T + b3_row).reshape(1, 1)   # (1, 1)  fused bias (scalar)
    return w_eff, bias_col, cw_row, cb


def regression_cubical_forward_xt(x_t, folded, *, threshold_prediction, num_labels):
    """x_t: (d, batch) float32 (batch already on the lane axis). Returns (batch, 1)."""
    w_eff, bias_col, cw_row, cb = folded
    d, batch = x_t.shape
    N = w_eff.shape[0]

    # ---- batch tile size ----------------------------------------------------
    # Large tiles amortize the per-grid-step pipeline overhead; the cap keeps the
    # double-buffered x^T / out tiles at ~8 MiB of VMEM (safe on all generations).
    tb = min(_TB_CAP, _round_up(batch, _LANE_CHUNK))
    if batch >= 4 * _LANE_CHUNK:
        # keep >= 4 grid steps: DMA/compute overlap + megacore sharding on v7x
        tb = min(tb, _round_up(pl.cdiv(batch, 4), _LANE_CHUNK))
    tb = max(tb, _LANE_CHUNK)
    nb = pl.cdiv(batch, tb)      # ragged last tile is masked by Pallas (no host-side pad)

    kernel = functools.partial(
        _regression_cubical_kernel,
        threshold_prediction=threshold_prediction,
        num_labels=num_labels,
        chunk=_LANE_CHUNK,
    )

    cost = pl.CostEstimate(
        flops=2 * batch * N * (d + 1),
        transcendentals=0,
        bytes_accessed=4 * batch * (d + 1) + 4 * (N * (d + 2) + 1),
    )

    out_t = pl.pallas_call(
        kernel,
        out_shape=jax.ShapeDtypeStruct((1, batch), jnp.float32),
        grid=(nb,),
        in_specs=[
            pl.BlockSpec((d, tb), lambda i: (0, i)),               # x^T tile
            pl.BlockSpec((N, d), lambda i: (0, 0)),                # w_eff (resident)
            pl.BlockSpec((N, 1), lambda i: (0, 0)),                # bias  (resident)
            pl.BlockSpec((1, N), lambda i: (0, 0)),                # cw row (resident)
            pl.BlockSpec(memory_space=pltpu.MemorySpace.SMEM),     # cb scalar
        ],
        out_specs=pl.BlockSpec((1, tb), lambda i: (0, i)),
        compiler_params=pltpu.CompilerParams(
            dimension_semantics=("parallel",),
            vmem_limit_bytes=32 * 1024 * 1024,    # v5e default scoped VMEM is only 16 MiB
        ),
        cost_estimate=cost,
    )(x_t, w_eff, bias_col, cw_row, cb)

    return out_t[0, :].reshape(batch, 1)          # (batch, 1), no trailing transpose


def regression_cubical_forward(x, params, *, threshold_prediction, num_labels):
    """x: (batch, d) float32 — module-compatible entry point. Returns (batch, 1)."""
    folded = fold_params(params)
    # The x.T here is one extra HBM pass; feed regression_cubical_forward_xt with
    # x already stored (d, batch) when the producing op allows it.
    return regression_cubical_forward_xt(
        x.T, folded, threshold_prediction=threshold_prediction, num_labels=num_labels
    )


# ----------------------------------------------------------------------------
# Deterministic parameter construction (mirrors the module's __init__)
# ----------------------------------------------------------------------------
def make_params(key, *, d, N, num_labels, data_bounds):
    group_size = N // d

    # shared_weight_matrix = eye(d)
    s = jnp.eye(d, dtype=jnp.float32)

    # weight_coefficients = ones(N)
    c = jnp.ones((N,), dtype=jnp.float32)

    # hidden_node_keys / one-hot group membership
    keys = jnp.repeat(jnp.arange(d, dtype=jnp.int32), group_size)          # (N,)
    g = jax.nn.one_hot(keys, d, dtype=jnp.float32)                          # (N, d)

    lb = jnp.asarray([data_bounds[i][0] for i in range(d)], jnp.float32)
    ub = jnp.asarray([data_bounds[i][1] for i in range(d)], jnp.float32)
    lower = lb[keys]
    upper = ub[keys]

    k_bias, k_w2, k_b2, k_w3, k_b3 = jax.random.split(key, 5)
    # bias = rand(N) * (lower - upper) - lower
    bias = jax.random.uniform(k_bias, (N,), jnp.float32) * (lower - upper) - lower

    # layer2 = Linear(N, num_labels);  output_layer = Linear(num_labels, 1)
    bound2 = 1.0 / jnp.sqrt(jnp.float32(N))
    w2 = jax.random.uniform(k_w2, (num_labels, N), jnp.float32, -bound2, bound2)
    b2 = jax.random.uniform(k_b2, (num_labels,), jnp.float32, -bound2, bound2)
    bound3 = 1.0 / jnp.sqrt(jnp.float32(num_labels))
    w3 = jax.random.uniform(k_w3, (1, num_labels), jnp.float32, -bound3, bound3)
    b3 = jax.random.uniform(k_b3, (1,), jnp.float32, -bound3, bound3)

    return (
        s,                          # (d, d)
        g,                          # (N, d)
        c.reshape(N, 1),            # (N, 1)
        bias.reshape(1, N),         # (1, N)
        w2,                         # (num_labels, N)
        b2.reshape(1, num_labels),  # (1, num_labels)
        w3,                         # (1, num_labels)
        b3.reshape(1, 1),           # (1, 1)
    )


# Pure-JAX reference of the PyTorch forward (unfused), for verification.
def reference_forward(x, params, *, threshold_prediction, num_labels):
    s, g, c_col, bias_row, w2, b2_row, w3, b3_row = params
    w_eff = (g @ s) * c_col                                   # (N, d)
    h = x @ w_eff.T + bias_row                                # (B, N)
    h = jnp.clip(h, 0.0, 1.0)
    y = h @ w2.T + b2_row                                     # (B, L)
    out = y @ w3.T + b3_row                                   # (B, 1)
    if threshold_prediction:
        out = jnp.clip(out, 0.0, float(num_labels - 1))
    return out


if __name__ == "__main__":
    # Small config consistent with the module: d features, N hidden nodes (N % d == 0)
    d = 4
    N = 32
    num_labels = 4
    batch = 8
    data_bounds = [[0.0, 1.0]] * d
    threshold_prediction = True

    key = jax.random.PRNGKey(0)
    k_params, k_x = jax.random.split(key)

    params = make_params(k_params, d=d, N=N, num_labels=num_labels,
                         data_bounds=data_bounds)
    x = jax.random.uniform(k_x, (batch, d), jnp.float32)       # layout: (batch, d)

    out = regression_cubical_forward(
        x, params, threshold_prediction=threshold_prediction, num_labels=num_labels
    )
    out = jax.block_until_ready(out)

    ref = reference_forward(
        x, params, threshold_prediction=threshold_prediction, num_labels=num_labels
    )
    assert out.shape == (batch, 1)
    assert jnp.allclose(out, ref, atol=1e-5, rtol=1e-4), (out, ref)

    print("KERNEL_OK")
</pallas_src>

<mosaic_0001>
module attributes {stable_mosaic.version = 11 : i64} {
  func.func @_regression_cubical_kernel(%arg0: i32, %arg1: memref<4x512xf32, #tpu.memory_space<vmem>>, %arg2: memref<32x4xf32, #tpu.memory_space<vmem>>, %arg3: memref<32x1xf32, #tpu.memory_space<vmem>>, %arg4: memref<1x32xf32, #tpu.memory_space<vmem>>, %arg5: memref<1x1xf32, #tpu.memory_space<smem>>, %arg6: memref<1x512xf32, #tpu.memory_space<vmem>>) attributes {dimension_semantics = [#tpu.dimension_semantics<parallel>], iteration_bounds = array<i64: 1>, scalar_prefetch = 0 : i64, scratch_operands = 0 : i64, tpu.core_type = #tpu.core_type<tc>, window_params = [{transform_indices = @transform_0, window_bounds = array<i64: 4, 512>}, {pipeline_mode = #tpu.pipeline_mode<synchronous>, transform_indices = @transform_1, window_bounds = array<i64: 32, 4>}, {pipeline_mode = #tpu.pipeline_mode<synchronous>, transform_indices = @transform_2, window_bounds = array<i64: 32, 1>}, {pipeline_mode = #tpu.pipeline_mode<synchronous>, transform_indices = @transform_3, window_bounds = array<i64: 1, 32>}, {transform_indices = @transform_4, window_bounds = array<i64: 1, 1>}, {transform_indices = @transform_5, window_bounds = array<i64: 1, 512>}]} {
    %c0 = arith.constant 0 : index
    %c0_0 = arith.constant 0 : index
    %0 = vector.load %arg2[%c0, %c0_0] : memref<32x4xf32, #tpu.memory_space<vmem>>, vector<32x4xf32>
    %c0_1 = arith.constant 0 : index
    %c0_2 = arith.constant 0 : index
    %1 = vector.load %arg4[%c0_1, %c0_2] : memref<1x32xf32, #tpu.memory_space<vmem>>, vector<1x32xf32>
    %c0_3 = arith.constant 0 : index
    %c0_4 = arith.constant 0 : index
    %2 = memref.load %arg5[%c0_3, %c0_4] : memref<1x1xf32, #tpu.memory_space<smem>>
    %c0_5 = arith.constant 0 : index
    %c0_6 = arith.constant 0 : index
    %3 = vector.load %arg3[%c0_5, %c0_6] : memref<32x1xf32, #tpu.memory_space<vmem>>, vector<32x1xf32>
    %4 = vector.shape_cast %3 : vector<32x1xf32> to vector<32x1xf32>
    %5 = vector.broadcast %4 : vector<32x1xf32> to vector<32x512xf32>
    %c0_i32 = arith.constant 0 : i32
    %c1_i32 = arith.constant 1 : i32
    %6 = arith.muli %c0_i32, %c1_i32 : i32
    %c0_i32_7 = arith.constant 0 : i32
    %7 = arith.addi %c0_i32_7, %6 : i32
    %c512_i32 = arith.constant 512 : i32
    %8 = arith.muli %7, %c512_i32 : i32
    %9 = tpu.assume_multiple %8, 512 : i32
    %c0_8 = arith.constant 0 : index
    %10 = arith.index_cast %9 : i32 to index
    %11 = vector.load %arg1[%c0_8, %10] : memref<4x512xf32, #tpu.memory_space<vmem>>, vector<4x512xf32>
    %cst = arith.constant dense<0.000000e+00> : vector<32x512xf32>
    %12 = tpu.matmul %0, %11, %cst {dimension_numbers = #tpu.dot_dimension_numbers<[1], [0], [0], [1], [0, 0, 1, 1], [], []>} : vector<32x4xf32>, vector<4x512xf32>, vector<32x512xf32> -> vector<32x512xf32>
    %13 = arith.addf %12, %5 : vector<32x512xf32>
    %cst_9 = arith.constant 0.000000e+00 : f32
    %cst_10 = arith.constant 1.000000e+00 : f32
    %14 = vector.broadcast %cst_9 : f32 to vector<32x512xf32>
    %15 = arith.maximumf %14, %13 : vector<32x512xf32>
    %16 = vector.broadcast %cst_10 : f32 to vector<32x512xf32>
    %17 = arith.minimumf %16, %15 : vector<32x512xf32>
    %cst_11 = arith.constant dense<0.000000e+00> : vector<1x512xf32>
    %18 = tpu.matmul %1, %17, %cst_11 {dimension_numbers = #tpu.dot_dimension_numbers<[1], [0], [0], [1], [0, 0, 1, 1], [], []>} : vector<1x32xf32>, vector<32x512xf32>, vector<1x512xf32> -> vector<1x512xf32>
    %19 = vector.broadcast %2 : f32 to vector<1x512xf32>
    %20 = arith.addf %18, %19 : vector<1x512xf32>
    %cst_12 = arith.constant 0.000000e+00 : f32
    %cst_13 = arith.constant 3.000000e+00 : f32
    %21 = vector.broadcast %cst_12 : f32 to vector<1x512xf32>
    %22 = arith.maximumf %21, %20 : vector<1x512xf32>
    %23 = vector.broadcast %cst_13 : f32 to vector<1x512xf32>
    %24 = arith.minimumf %23, %22 : vector<1x512xf32>
    %c0_14 = arith.constant 0 : index
    %25 = arith.index_cast %9 : i32 to index
    %26 = vector.load %arg6[%c0_14, %25] : memref<1x512xf32, #tpu.memory_space<vmem>>, vector<1x512xf32>
    tpu.vector_store %arg6[%c0_14, %25], %24 {strides = array<i32>} : memref<1x512xf32, #tpu.memory_space<vmem>>, vector<1x512xf32>,
    %c1_i32_15 = arith.constant 1 : i32
    return
  }
  func.func @transform_0(%arg0: i32) -> (i32, i32) {
    %c0_i32 = arith.constant 0 : i32
    %c0_i32_0 = arith.constant 0 : i32
    return %c0_i32, %arg0 : i32, i32
  }
  func.func @transform_1(%arg0: i32) -> (i32, i32) {
    %c0_i32 = arith.constant 0 : i32
    %c0_i32_0 = arith.constant 0 : i32
    %c0_i32_1 = arith.constant 0 : i32
    return %c0_i32, %c0_i32_0 : i32, i32
  }
  func.func @transform_2(%arg0: i32) -> (i32, i32) {
    %c0_i32 = arith.constant 0 : i32
    %c0_i32_0 = arith.constant 0 : i32
    %c0_i32_1 = arith.constant 0 : i32
    return %c0_i32, %c0_i32_0 : i32, i32
  }
  func.func @transform_3(%arg0: i32) -> (i32, i32) {
    %c0_i32 = arith.constant 0 : i32
    %c0_i32_0 = arith.constant 0 : i32
    %c0_i32_1 = arith.constant 0 : i32
    return %c0_i32, %c0_i32_0 : i32, i32
  }
  func.func @transform_4(%arg0: i32) -> (i32, i32) {
    %c0_i32 = arith.constant 0 : i32
    %c0_i32_0 = arith.constant 0 : i32
    %c0_i32_1 = arith.constant 0 : i32
    return %c0_i32, %c0_i32_0 : i32, i32
  }
  func.func @transform_5(%arg0: i32) -> (i32, i32) {
    %c0_i32 = arith.constant 0 : i32
    %c0_i32_0 = arith.constant 0 : i32
    return %c0_i32, %arg0 : i32, i32
  }
}

</mosaic_0001>

<llo_original>
// kernel: tpu_custom_call.1
$region0: #{tpu_custom_call.1}
  #allocation0 [shape = 'u32[]', space=smem, size = 0x4, offset = 0x4, fixed_abs, tag = 'smem constant byte address 0x4 - core index']
  #allocation1 [shape = 'u32[144,128]{1,0:T(1,128)}', space=vmem, size = 0x12000, scoped, tag = 'internal scratch']
  #allocation2 [shape = 'f32[1,1]{1,0:T(1,128)S(6)}', space=smem, size = 0x200, scoped, tag = 'scoped memory for tpu_custom_call.1']
  %s0 = inlined_call_operand.vmem [shape: f32[4,8], index: 0, kind: input, shape index: {}]
  %s1 = inlined_call_operand.vmem [shape: f32[32,4], index: 1, kind: input, shape index: {}]
  %s2 = inlined_call_operand.vmem [shape: f32[32,1], index: 2, kind: input, shape index: {}]
  %s3 = inlined_call_operand.vmem [shape: f32[1,32], index: 3, kind: input, shape index: {}]
  %s4 = inlined_call_operand.<no memory space> [shape: f32[1,1], index: 4, kind: input, shape index: {}]
  %s5 = inlined_call_operand.hbm [shape: f32[1,8], index: 5, kind: output, shape index: {}]
  %s6 = sld [smem:[#allocation0]]
  $region30: #{tpu_custom_call.1} parent=0
    _
  %s8 = ssub.s32 1, %s6
  %s9 = scalar_select 0, %s8, %s6
  %10 = sst [smem:[#allocation2]] %s4
  $region1: #{tpu_custom_call.1} parent=0
    #allocation3 [shape = 'u8[2048]{0}', space=vmem, size = 0x800, scoped, tag = 'output window, operand 0, single buffered']
    #allocation4 [shape = 's32[1]{0}', space=sflag, size = 0x4, scoped, tag = 'scoped memory for tpu_custom_call.1']
    %11 = vsyncpa [#allocation4], 0
    // Predicated region
    $region2: #{tpu_custom_call.1} parent=1 // pred_check
      _
    $region3: #{tpu_custom_call.1} parent=1 // pred_check_branch
      %13 = sbr.rel (0) target = $region5
    $region4: #{tpu_custom_call.1} parent=1 // pred_region
      _
    $region5: #{tpu_custom_call.1} parent=1 // pred_fallthru
      _
    // Predicated region
    $region6: #{tpu_custom_call.1} parent=1 // pred_check
      _
    $region7: #{tpu_custom_call.1} parent=1 // pred_check_branch
      %15 = sbr.rel (0) target = $region9
    $region8: #{tpu_custom_call.1} parent=1 // pred_region
      _
    $region9: #{tpu_custom_call.1} parent=1 // pred_fallthru
      _
    // Predicated region
    $region10: #{tpu_custom_call.1} parent=1 // pred_check
      _
    $region11: #{tpu_custom_call.1} parent=1 // pred_check_branch
      %17 = sbr.rel (0) target = $region13
    $region12: #{tpu_custom_call.1} parent=1 // pred_region
      _
    $region13: #{tpu_custom_call.1} parent=1 // pred_fallthru
      _
    // Predicated region
    $region14: #{tpu_custom_call.1} parent=1 // pred_check
      _
    $region15: #{tpu_custom_call.1} parent=1 // pred_check_branch
      %19 = sbr.rel (0) target = $region17
    $region16: #{tpu_custom_call.1} parent=1 // pred_region
      _
    $region17: #{tpu_custom_call.1} parent=1 // pred_fallthru
      _
    // Predicated region
    $region18: #{tpu_custom_call.1} parent=1 // pred_check
      _
    $region19: #{tpu_custom_call.1} parent=1 // pred_check_branch
      %21 = sbr.rel (0) target = $region21
    $region20: #{tpu_custom_call.1} parent=1 // pred_region
      _
    $region21: #{tpu_custom_call.1} parent=1 // pred_fallthru
      _
    %v22 = vld [vmem:[%s1] sm:$0xff]
    %v23 = vld [vmem:[%s1 + $0x8] sm:$0xff]
    %v24 = vld [vmem:[%s1 + $0x10] sm:$0xff]
    %v25 = vld [vmem:[%s1 + $0x18] sm:$0xff]
    %v26 = vld [vmem:[%s3] sm:$0x1]
    %s27 = sld [smem:[#allocation2]]
    %v28 = vld [vmem:[%s2] sm:$0xff]
    %v29 = vld [vmem:[%s2 + $0x8] sm:$0xff]
    %v30 = vld [vmem:[%s2 + $0x10] sm:$0xff]
    %v31 = vld [vmem:[%s2 + $0x18] sm:$0xff]
    %33 = vset.pattern.permute.xlu0 0
    %34 = vperm.xlu0 %33, %v28
    %v35 = vpop.permute.xlu0 %34
    %38 = vset.pattern.permute.xlu0 0
    %39 = vperm.xlu0 %38, %v29
    %v40 = vpop.permute.xlu0 %39
    %43 = vset.pattern.permute.xlu0 0
    %44 = vperm.xlu0 %43, %v30
    %v45 = vpop.permute.xlu0 %44
    %48 = vset.pattern.permute.xlu0 0
    %49 = vperm.xlu0 %48, %v31
    %v50 = vpop.permute.xlu0 %49
    %v52 = vld [vmem:[%s0] sm:$0xff]
    %v53 = vld [vmem:[%s0 + $0x8] sm:$0xff]
    %v56 = vcombine.high %v52, %v52
    %v57 = vcombine.high %v53, %v53
    %vm58 = vcmask 31744
    %v60 = vsel %vm58, %v22, 0
    %v63 = vsel %vm58, %v23, 0
    %v66 = vsel %vm58, %v24, 0
    %v69 = vsel %vm58, %v25, 0
    %vm71 = vcmask 1043456
    %v72 = vsel %vm71, %v52, 0
    %v74 = vsel %vm71, %v56, 0
    %v76 = vsel %vm71, %v53, 0
    %v78 = vsel %vm71, %v57, 0
    %80 = vmatprep.subr.mxu0 0.0
    %81 = vmatpush1.msra.mxu0 0.0
    %82 = vmatprep.subr.mxu0 0.0
    %83 = vmatpush1.msra.mxu0 0.0
    %84 = vmatprep.subr.mxu0 0.0
    %85 = vmatpush1.msra.mxu0 0.0
    %86 = vmatprep.subr.mxu0 0.0
    %87 = vmatpush1.msra.mxu0 0.0
    %88 = vmatprep.subr.mxu0 0.0
    %89 = vmatpush1.msra.mxu0 0.0
    %90 = vmatprep.subr.mxu0 0.0
    %91 = vmatpush1.msra.mxu0 0.0
    %92 = vmatprep.subr.mxu0 0.0
    %93 = vmatpush1.msra.mxu0 0.0
    %94 = vmatprep.subr.mxu0 0.0
    %95 = vmatpush1.msra.mxu0 0.0
    %96 = vmatprep.subr.mxu0 0.0
    %97 = vmatpush1.msra.mxu0 0.0
    %98 = vmatprep.subr.mxu0 0.0
    %99 = vmatpush1.msra.mxu0 0.0
    %100 = vmatprep.subr.mxu0 0.0
    %101 = vmatpush1.msra.mxu0 0.0
    %102 = vmatprep.subr.mxu0 0.0
    %103 = vmatpush1.msra.mxu0 0.0
    %104 = vmatprep.subr.mxu0 0.0
    %105 = vmatpush1.msra.mxu0 0.0
    %106 = vmatprep.subr.mxu0 0.0
    %107 = vmatpush1.msra.mxu0 0.0
    %108 = vmatprep.subr.mxu0 0.0
    %109 = vmatpush1.msra.mxu0 0.0
    %110 = vmatprep.subr.mxu0 %v74
    %111 = vmatpush1.msra.mxu0 %v72
    %112 = vmatprep.subr.mxu0 0.0
    %113 = vmatpush2.msra.mxu0 0.0
    %114 = vmatprep.subr.mxu0 0.0
    %115 = vmatpush2.msra.mxu0 0.0
    %116 = vmatprep.subr.mxu0 0.0
    %117 = vmatpush2.msra.mxu0 0.0
    %118 = vmatprep.subr.mxu0 0.0
    %119 = vmatpush2.msra.mxu0 0.0
    %120 = vmatprep.subr.mxu0 0.0
    %121 = vmatpush2.msra.mxu0 0.0
    %122 = vmatprep.subr.mxu0 0.0
    %123 = vmatpush2.msra.mxu0 0.0
    %124 = vmatprep.subr.mxu0 0.0
    %125 = vmatpush2.msra.mxu0 0.0
    %126 = vmatprep.subr.mxu0 0.0
    %127 = vmatpush2.msra.mxu0 0.0
    %128 = vmatprep.subr.mxu0 0.0
    %129 = vmatpush2.msra.mxu0 0.0
    %130 = vmatprep.subr.mxu0 0.0
    %131 = vmatpush2.msra.mxu0 0.0
    %132 = vmatprep.subr.mxu0 0.0
    %133 = vmatpush2.msra.mxu0 0.0
    %134 = vmatprep.subr.mxu0 0.0
    %135 = vmatpush2.msra.mxu0 0.0
    %136 = vmatprep.subr.mxu0 0.0
    %137 = vmatpush2.msra.mxu0 0.0
    %138 = vmatprep.subr.mxu0 0.0
    %139 = vmatpush2.msra.mxu0 0.0
    %140 = vmatprep.subr.mxu0 0.0
    %141 = vmatpush2.msra.mxu0 0.0
    %142 = vmatprep.subr.mxu0 0.0
    %143 = vmatpush2.msra.mxu0 0.0
    %144 = vmatprep.mubr.f32.mxu0 0.0
    %145 = vmatmul.mubr.f32.gmra.mxu0 %v60
    %v146 = vpop.f32.mrf.mxu0
    %v147 = vadd.f32 %v35, %v146
    %v148 = vpop.f32.mrf.mxu0
    %v149 = vadd.f32 %v35, %v148
    %150 = vmatprep.mubr.f32.mxu0 0.0
    %151 = vmatmul.mubr.f32.gmra.mxu0 %v63
    %v152 = vpop.f32.mrf.mxu0
    %v153 = vadd.f32 %v40, %v152
    %v154 = vpop.f32.mrf.mxu0
    %v155 = vadd.f32 %v40, %v154
    %156 = vmatprep.mubr.f32.mxu0 0.0
    %157 = vmatmul.mubr.f32.gmra.mxu0 %v66
    %v158 = vpop.f32.mrf.mxu0
    %v159 = vadd.f32 %v45, %v158
    %v160 = vpop.f32.mrf.mxu0
    %v161 = vadd.f32 %v45, %v160
    %162 = vmatprep.mubr.f32.mxu0 0.0
    %163 = vmatmul.mubr.f32.gmra.mxu0 %v69
    %v164 = vpop.f32.mrf.mxu0
    %v165 = vadd.f32 %v50, %v164
    %v166 = vpop.f32.mrf.mxu0
    %v167 = vadd.f32 %v50, %v166
    %168 = vdwg.mxu0
    %169 = vmatprep.subr.mxu0 0.0
    %170 = vmatpush1.msra.mxu0 0.0
    %171 = vmatprep.subr.mxu0 0.0
    %172 = vmatpush1.msra.mxu0 0.0
    %173 = vmatprep.subr.mxu0 0.0
    %174 = vmatpush1.msra.mxu0 0.0
    %175 = vmatprep.subr.mxu0 0.0
    %176 = vmatpush1.msra.mxu0 0.0
    %177 = vmatprep.subr.mxu0 0.0
    %178 = vmatpush1.msra.mxu0 0.0
    %179 = vmatprep.subr.mxu0 0.0
    %180 = vmatpush1.msra.mxu0 0.0
    %181 = vmatprep.subr.mxu0 0.0
    %182 = vmatpush1.msra.mxu0 0.0
    %183 = vmatprep.subr.mxu0 0.0
    %184 = vmatpush1.msra.mxu0 0.0
    %185 = vmatprep.subr.mxu0 0.0
    %186 = vmatpush1.msra.mxu0 0.0
    %187 = vmatprep.subr.mxu0 0.0
    %188 = vmatpush1.msra.mxu0 0.0
    %189 = vmatprep.subr.mxu0 0.0
    %190 = vmatpush1.msra.mxu0 0.0
    %191 = vmatprep.subr.mxu0 0.0
    %192 = vmatpush1.msra.mxu0 0.0
    %193 = vmatprep.subr.mxu0 0.0
    %194 = vmatpush1.msra.mxu0 0.0
    %195 = vmatprep.subr.mxu0 0.0
    %196 = vmatpush1.msra.mxu0 0.0
    %197 = vmatprep.subr.mxu0 0.0
    %198 = vmatpush1.msra.mxu0 0.0
    %199 = vmatprep.subr.mxu0 %v78
    %200 = vmatpush1.msra.mxu0 %v76
    %201 = vmatprep.subr.mxu0 0.0
    %202 = vmatpush2.msra.mxu0 0.0
    %203 = vmatprep.subr.mxu0 0.0
    %204 = vmatpush2.msra.mxu0 0.0
    %205 = vmatprep.subr.mxu0 0.0
    %206 = vmatpush2.msra.mxu0 0.0
    %207 = vmatprep.subr.mxu0 0.0
    %208 = vmatpush2.msra.mxu0 0.0
    %209 = vmatprep.subr.mxu0 0.0
    %210 = vmatpush2.msra.mxu0 0.0
    %211 = vmatprep.subr.mxu0 0.0
    %212 = vmatpush2.msra.mxu0 0.0
    %213 = vmatprep.subr.mxu0 0.0
    %214 = vmatpush2.msra.mxu0 0.0
    %215 = vmatprep.subr.mxu0 0.0
    %216 = vmatpush2.msra.mxu0 0.0
    %217 = vmatprep.subr.mxu0 0.0
    %218 = vmatpush2.msra.mxu0 0.0
    %219 = vmatprep.subr.mxu0 0.0
    %220 = vmatpush2.msra.mxu0 0.0
    %221 = vmatprep.subr.mxu0 0.0
    %222 = vmatpush2.msra.mxu0 0.0
    %223 = vmatprep.subr.mxu0 0.0
    %224 = vmatpush2.msra.mxu0 0.0
    %225 = vmatprep.subr.mxu0 0.0
    %226 = vmatpush2.msra.mxu0 0.0
    %227 = vmatprep.subr.mxu0 0.0
    %228 = vmatpush2.msra.mxu0 0.0
    %229 = vmatprep.subr.mxu0 0.0
    %230 = vmatpush2.msra.mxu0 0.0
    %231 = vmatprep.subr.mxu0 0.0
    %232 = vmatpush2.msra.mxu0 0.0
    %233 = vmatprep.mubr.f32.mxu0 0.0
    %234 = vmatmul.mubr.f32.gmra.mxu0 %v60
    %v235 = vpop.f32.mrf.mxu0
    %v236 = vadd.f32 %v35, %v235
    %v237 = vpop.f32.mrf.mxu0
    %v238 = vadd.f32 %v35, %v237
    %239 = vmatprep.mubr.f32.mxu0 0.0
    %240 = vmatmul.mubr.f32.gmra.mxu0 %v63
    %v241 = vpop.f32.mrf.mxu0
    %v242 = vadd.f32 %v40, %v241
    %v243 = vpop.f32.mrf.mxu0
    %v244 = vadd.f32 %v40, %v243
    %245 = vmatprep.mubr.f32.mxu0 0.0
    %246 = vmatmul.mubr.f32.gmra.mxu0 %v66
    %v247 = vpop.f32.mrf.mxu0
    %v248 = vadd.f32 %v45, %v247
    %v249 = vpop.f32.mrf.mxu0
    %v250 = vadd.f32 %v45, %v249
    %251 = vmatprep.mubr.f32.mxu0 0.0
    %252 = vmatmul.mubr.f32.gmra.mxu0 %v69
    %v253 = vpop.f32.mrf.mxu0
    %v254 = vadd.f32 %v50, %v253
    %v255 = vpop.f32.mrf.mxu0
    %v256 = vadd.f32 %v50, %v255
    %257 = vdwg.mxu0
    %v258 = vmax.f32 %v147, 0.0
    %v259 = vmax.f32 %v149, 0.0
    %v260 = vmax.f32 %v236, 0.0
    %v261 = vmax.f32 %v238, 0.0
    %v262 = vmax.f32 %v153, 0.0
    %v263 = vmax.f32 %v155, 0.0
    %v264 = vmax.f32 %v242, 0.0
    %v265 = vmax.f32 %v244, 0.0
    %v266 = vmax.f32 %v159, 0.0
    %v267 = vmax.f32 %v161, 0.0
    %v268 = vmax.f32 %v248, 0.0
    %v269 = vmax.f32 %v250, 0.0
    %v270 = vmax.f32 %v165, 0.0
    %v271 = vmax.f32 %v167, 0.0
    %v272 = vmax.f32 %v254, 0.0
    %v273 = vmax.f32 %v256, 0.0
    %v274 = vmin.f32 %v258, 1.0
    %v275 = vmin.f32 %v259, 1.0
    %v276 = vmin.f32 %v260, 1.0
    %v277 = vmin.f32 %v261, 1.0
    %v278 = vmin.f32 %v262, 1.0
    %v279 = vmin.f32 %v263, 1.0
    %v280 = vmin.f32 %v264, 1.0
    %v281 = vmin.f32 %v265, 1.0
    %v282 = vmin.f32 %v266, 1.0
    %v283 = vmin.f32 %v267, 1.0
    %v284 = vmin.f32 %v268, 1.0
    %v285 = vmin.f32 %v269, 1.0
    %v286 = vmin.f32 %v270, 1.0
    %v287 = vmin.f32 %v271, 1.0
    %v288 = vmin.f32 %v272, 1.0
    %v289 = vmin.f32 %v273, 1.0
    %v290 = vstv %s27
    %vm291 = vcmask 261120
    %v293 = vsel %vm291, %v26, 0
    %295 = vmatprep.subr.mxu0 0.0
    %296 = vmatpush1.msra.mxu0 0.0
    %297 = vmatprep.subr.mxu0 0.0
    %298 = vmatpush1.msra.mxu0 0.0
    %299 = vmatprep.subr.mxu0 0.0
    %300 = vmatpush1.msra.mxu0 0.0
    %301 = vmatprep.subr.mxu0 0.0
    %302 = vmatpush1.msra.mxu0 0.0
    %303 = vmatprep.subr.mxu0 0.0
    %304 = vmatpush1.msra.mxu0 0.0
    %305 = vmatprep.subr.mxu0 0.0
    %306 = vmatpush1.msra.mxu0 0.0
    %307 = vmatprep.subr.mxu0 0.0
    %308 = vmatpush1.msra.mxu0 0.0
    %309 = vmatprep.subr.mxu0 0.0
    %310 = vmatpush1.msra.mxu0 0.0
    %311 = vmatprep.subr.mxu0 0.0
    %312 = vmatpush1.msra.mxu0 0.0
    %313 = vmatprep.subr.mxu0 0.0
    %314 = vmatpush1.msra.mxu0 0.0
    %315 = vmatprep.subr.mxu0 0.0
    %316 = vmatpush1.msra.mxu0 0.0
    %317 = vmatprep.subr.mxu0 0.0
    %318 = vmatpush1.msra.mxu0 0.0
    %319 = vmatprep.subr.mxu0 %v287
    %320 = vmatpush1.msra.mxu0 %v286
    %321 = vmatprep.subr.mxu0 %v283
    %322 = vmatpush1.msra.mxu0 %v282
    %323 = vmatprep.subr.mxu0 %v279
    %324 = vmatpush1.msra.mxu0 %v278
    %325 = vmatprep.subr.mxu0 %v275
    %326 = vmatpush1.msra.mxu0 %v274
    %327 = vmatprep.subr.mxu0 0.0
    %328 = vmatpush2.msra.mxu0 0.0
    %329 = vmatprep.subr.mxu0 0.0
    %330 = vmatpush2.msra.mxu0 0.0
    %331 = vmatprep.subr.mxu0 0.0
    %332 = vmatpush2.msra.mxu0 0.0
    %333 = vmatprep.subr.mxu0 0.0
    %334 = vmatpush2.msra.mxu0 0.0
    %335 = vmatprep.subr.mxu0 0.0
    %336 = vmatpush2.msra.mxu0 0.0
    %337 = vmatprep.subr.mxu0 0.0
    %338 = vmatpush2.msra.mxu0 0.0
    %339 = vmatprep.subr.mxu0 0.0
    %340 = vmatpush2.msra.mxu0 0.0
    %341 = vmatprep.subr.mxu0 0.0
    %342 = vmatpush2.msra.mxu0 0.0
    %343 = vmatprep.subr.mxu0 0.0
    %344 = vmatpush2.msra.mxu0 0.0
    %345 = vmatprep.subr.mxu0 0.0
    %346 = vmatpush2.msra.mxu0 0.0
    %347 = vmatprep.subr.mxu0 0.0
    %348 = vmatpush2.msra.mxu0 0.0
    %349 = vmatprep.subr.mxu0 0.0
    %350 = vmatpush2.msra.mxu0 0.0
    %351 = vmatprep.subr.mxu0 0.0
    %352 = vmatpush2.msra.mxu0 0.0
    %353 = vmatprep.subr.mxu0 0.0
    %354 = vmatpush2.msra.mxu0 0.0
    %355 = vmatprep.subr.mxu0 0.0
    %356 = vmatpush2.msra.mxu0 0.0
    %357 = vmatprep.subr.mxu0 0.0
    %358 = vmatpush2.msra.mxu0 0.0
    %359 = vmatprep.mubr.f32.mxu0 0.0
    %360 = vmatmul.mubr.f32.gmra.mxu0 %v293
    %v361 = vpop.f32.mrf.mxu0
    %v362 = vadd.f32 %v290, %v361
    %v363 = vpop.f32.mrf.mxu0
    %v364 = vadd.f32 %v290, %v363
    %365 = vdwg.mxu0
    %366 = vmatprep.subr.mxu0 0.0
    %367 = vmatpush1.msra.mxu0 0.0
    %368 = vmatprep.subr.mxu0 0.0
    %369 = vmatpush1.msra.mxu0 0.0
    %370 = vmatprep.subr.mxu0 0.0
    %371 = vmatpush1.msra.mxu0 0.0
    %372 = vmatprep.subr.mxu0 0.0
    %373 = vmatpush1.msra.mxu0 0.0
    %374 = vmatprep.subr.mxu0 0.0
    %375 = vmatpush1.msra.mxu0 0.0
    %376 = vmatprep.subr.mxu0 0.0
    %377 = vmatpush1.msra.mxu0 0.0
    %378 = vmatprep.subr.mxu0 0.0
    %379 = vmatpush1.msra.mxu0 0.0
    %380 = vmatprep.subr.mxu0 0.0
    %381 = vmatpush1.msra.mxu0 0.0
    %382 = vmatprep.subr.mxu0 0.0
    %383 = vmatpush1.msra.mxu0 0.0
    %384 = vmatprep.subr.mxu0 0.0
    %385 = vmatpush1.msra.mxu0 0.0
    %386 = vmatprep.subr.mxu0 0.0
    %387 = vmatpush1.msra.mxu0 0.0
    %388 = vmatprep.subr.mxu0 0.0
    %389 = vmatpush1.msra.mxu0 0.0
    %390 = vmatprep.subr.mxu0 %v289
    %391 = vmatpush1.msra.mxu0 %v288
    %392 = vmatprep.subr.mxu0 %v285
    %393 = vmatpush1.msra.mxu0 %v284
    %394 = vmatprep.subr.mxu0 %v281
    %395 = vmatpush1.msra.mxu0 %v280
    %396 = vmatprep.subr.mxu0 %v277
    %397 = vmatpush1.msra.mxu0 %v276
    %398 = vmatprep.subr.mxu0 0.0
    %399 = vmatpush2.msra.mxu0 0.0
    %400 = vmatprep.subr.mxu0 0.0
    %401 = vmatpush2.msra.mxu0 0.0
    %402 = vmatprep.subr.mxu0 0.0
    %403 = vmatpush2.msra.mxu0 0.0
    %404 = vmatprep.subr.mxu0 0.0
    %405 = vmatpush2.msra.mxu0 0.0
    %406 = vmatprep.subr.mxu0 0.0
    %407 = vmatpush2.msra.mxu0 0.0
    %408 = vmatprep.subr.mxu0 0.0
    %409 = vmatpush2.msra.mxu0 0.0
    %410 = vmatprep.subr.mxu0 0.0
    %411 = vmatpush2.msra.mxu0 0.0
    %412 = vmatprep.subr.mxu0 0.0
    %413 = vmatpush2.msra.mxu0 0.0
    %414 = vmatprep.subr.mxu0 0.0
    %415 = vmatpush2.msra.mxu0 0.0
    %416 = vmatprep.subr.mxu0 0.0
    %417 = vmatpush2.msra.mxu0 0.0
    %418 = vmatprep.subr.mxu0 0.0
    %419 = vmatpush2.msra.mxu0 0.0
    %420 = vmatprep.subr.mxu0 0.0
    %421 = vmatpush2.msra.mxu0 0.0
    %422 = vmatprep.subr.mxu0 0.0
    %423 = vmatpush2.msra.mxu0 0.0
    %424 = vmatprep.subr.mxu0 0.0
    %425 = vmatpush2.msra.mxu0 0.0
    %426 = vmatprep.subr.mxu0 0.0
    %427 = vmatpush2.msra.mxu0 0.0
    %428 = vmatprep.subr.mxu0 0.0
    %429 = vmatpush2.msra.mxu0 0.0
    %430 = vmatprep.mubr.f32.mxu0 0.0
    %431 = vmatmul.mubr.f32.gmra.mxu0 %v293
    %v432 = vpop.f32.mrf.mxu0
    %v433 = vadd.f32 %v290, %v432
    %v434 = vpop.f32.mrf.mxu0
    %v435 = vadd.f32 %v290, %v434
    %436 = vdwg.mxu0
    %v437 = vmax.f32 %v362, 0.0
    %v438 = vmax.f32 %v364, 0.0
    %v439 = vmax.f32 %v433, 0.0
    %v440 = vmax.f32 %v435, 0.0
    %v441 = vmin.f32 %v437, 3.0
    %v442 = vmin.f32 %v438, 3.0
    %v443 = vmin.f32 %v439, 3.0
    %v444 = vmin.f32 %v440, 3.0
    %v449 = vcombine.low %v441, %v442
    %v450 = vcombine.low %v443, %v444
    %v452 = vunpack.c.l.s4 1966171168
    %v453 = vunpack.c.0.s8 %v452
    %v454 = vlaneseq
    %v455 = vshrl.u32 %v454, 7
    %v456 = vsub.s32 %v453, %v455
    %v457 = vrot.slane %v449, %v456
    %v459 = vunpack.c.l.s4 1966171168
    %v460 = vunpack.c.0.s8 %v459
    %v461 = vlaneseq
    %v462 = vshrl.u32 %v461, 7
    %v463 = vsub.s32 %v460, %v462
    %v464 = vrot.slane %v450, %v463
    %v465 = vcombine.low %v457, %v464
    %v467 = vunpack.c.l.s4 1966171168
    %v468 = vunpack.c.0.s8 %v467
    %v469 = vlaneseq
    %v470 = vshrl.u32 %v469, 7
    %v471 = vsub.s32 %v468, %v470
    %v472 = vrot.slane %v465, %v471
    %v474 = vlaneseq
    %vm475 = vcmp.ge.s32.totalorder %v474, 0
    %vm476 = vcmp.lt.s32.totalorder %v474, 512
    %vm477 = vmand %vm475, %vm476
    %478 = vst.msk [vmem:[#allocation3] sm:$0xf] %vm477, %v472
    // Predicated region
    $region22: #{tpu_custom_call.1} parent=1 // pred_check
      _
    $region23: #{tpu_custom_call.1} parent=1 // pred_check_branch
      %480 = sbr.rel (0) target = $region25
    $region24: #{tpu_custom_call.1} parent=1 // pred_region
      %s482 = ssub.s32 64, 16
      %483 = vsyncadd [#allocation4], %s482
      %s485 = sshll.u32 [#allocation3], 4
      %s486 = int_to_ptr.vmem [resolvable:$true] %s485
      %488 = dma.vmem_to_hbm [thread:$0]  %s486, 16, %s5, [#allocation4]
    $region25: #{tpu_custom_call.1} parent=1 // pred_fallthru
      _
    // Predicated region
    $region26: #{tpu_custom_call.1} parent=1 // pred_check
      _
    $region27: #{tpu_custom_call.1} parent=1 // pred_check_branch
      %490 = sbr.rel (0) target = $region29
    $region28: #{tpu_custom_call.1} parent=1 // pred_region
      %491 = dma.done [#allocation4], 64
    $region29: #{tpu_custom_call.1} parent=1 // pred_fallthru
      _
    %492 = vsyncpa [#allocation4], 1

</llo_original>
